<compile_context>
chip_gen: v6e
topology: v6e:2x2x1
jax: 0.10.0
libtpu: 0.0.40
codegen_flags: <defaults>
</compile_context>

<pallas_src>
import functools

import jax
import jax.numpy as jnp
from jax.experimental import pallas as pl
from jax.experimental.pallas import tpu as pltpu


def _cve_kernel(x_ref, w2_ref, p_ref, o_ref, *, max_value: float, eps: float):
    # x_ref: [tm, 1] f32   w2_ref: [D, D] (bf16, (in, out) order)
    # p_ref: [8, D] f32    rows: w1, b1, b2, gamma, beta, 0, 0, 0
    # o_ref: [tm, D]
    w1 = p_ref[0:1, :]
    b1 = p_ref[1:2, :]
    b2 = p_ref[2:3, :]
    gamma = p_ref[3:4, :]
    beta = p_ref[4:5, :]

    # clamp(max=max_value), then Linear(1, D) as broadcast multiply + bias, ReLU.
    x = jnp.minimum(x_ref[...], max_value)                      # [tm, 1]
    h = jnp.maximum(x * w1 + b1, 0.0)                           # [tm, D]

    # Linear(D, D) on the MXU in bf16, accumulate in f32.
    y = jnp.dot(h.astype(w2_ref.dtype), w2_ref[...],
                preferred_element_type=jnp.float32) + b2        # [tm, D] f32

    # LayerNorm over the feature dim (no padded lanes -> no masking needed).
    mean = jnp.mean(y, axis=-1, keepdims=True)
    yc = y - mean
    var = jnp.mean(yc * yc, axis=-1, keepdims=True)
    out = yc * jax.lax.rsqrt(var + eps) * gamma + beta
    o_ref[...] = out.astype(o_ref.dtype)


def _vmem_capacity_bytes(default=64 * 1024 * 1024):
    """Best-effort VMEM capacity query; falls back to the v7x-safe 64 MiB."""
    try:
        info = pltpu.get_tpu_info()
        cap = getattr(info, "vmem_capacity_bytes", None)
        if cap:
            return int(cap)
    except Exception:
        pass
    return default


def prepare_cve_params(w1, b1, w2, b2, gamma, beta, *, dot_dtype=jnp.bfloat16):
    """One-time parameter prep (call when weights are set, not per forward).

    w1/b1/b2/gamma/beta: [D].  w2: [D, D] in (in, out) order, i.e. the
    transpose of PyTorch Linear.weight.  Returns (w2_cast, packed_params)
    where packed_params is an [8, D] f32 slab (rows: w1,b1,b2,gamma,beta,0,0,0)
    so the kernel fetches all per-feature rows with a single DMA.
    """
    D = w2.shape[0]
    assert w2.shape == (D, D), "w2 must be (d_model, d_model) in (in, out) order"

    def _row(v):
        return v.astype(jnp.float32).reshape(-1)

    zero = jnp.zeros((D,), jnp.float32)
    params = jnp.stack([_row(w1), _row(b1), _row(b2), _row(gamma), _row(beta),
                        zero, zero, zero], axis=0)              # [8, D]
    return w2.astype(dot_dtype), params


def continuous_value_encoder(x, w2p, params, *, max_value: float = 512.0,
                             eps: float = 1e-5, tm: int = 2048,
                             out_dtype=jnp.float32):
    """x: [B, S] float.  w2p/params come from prepare_cve_params().
    Returns [B, S, D] in out_dtype."""
    B, S = x.shape
    D = w2p.shape[0]
    N = B * S

    w2_itemsize = jnp.dtype(w2p.dtype).itemsize
    out_itemsize = jnp.dtype(out_dtype).itemsize
    d_lay = ((D + 127) // 128) * 128   # lane-padded width, for VMEM accounting only

    def _round8(v):
        return max(8, ((v + 7) // 8) * 8)

    # Row tile: multiple of 8, no bigger than needed, and small enough that the
    # grid has >= 2 steps (so both v7x TensorCores get work; costs ~nothing on
    # single-TC v5e/v6e).
    tm = min(_round8(tm), _round8(N))
    tm = min(tm, _round8(pl.cdiv(N, 2)))

    cap = _vmem_capacity_bytes()
    budget = (cap * 5) // 8          # tile-size budget
    vmem_limit = (cap * 3) // 4      # scoped VMEM limit handed to Mosaic

    def _vmem_est(t):
        return (2 * t * 128 * 4                      # x blocks (lane-padded), double-buffered
                + d_lay * d_lay * w2_itemsize        # w2, single-buffered
                + 8 * d_lay * 4                      # packed params, single-buffered
                + 2 * t * d_lay * out_itemsize       # output blocks, double-buffered
                + 3 * t * d_lay * 4)                 # in-kernel f32 intermediates

    while tm > 8 and _vmem_est(tm) > budget:
        tm = _round8(tm // 2)

    x2 = x.reshape(N, 1).astype(jnp.float32)

    kernel = functools.partial(_cve_kernel, max_value=float(max_value),
                               eps=float(eps))

    cost = pl.CostEstimate(
        flops=2 * N * D * D + 10 * N * D,
        transcendentals=N,
        bytes_accessed=(4 * N                        # x column
                        + D * D * w2_itemsize        # w2
                        + 8 * D * 4                  # packed params
                        + N * D * out_itemsize))     # output

    def _call(single_buffer: bool):
        if single_buffer:
            # Constant-index blocks never re-DMA; one buffer is enough.
            w2_spec = pl.BlockSpec((D, D), lambda i: (0, 0),
                                   pipeline_mode=pl.Buffered(1))
            p_spec = pl.BlockSpec((8, D), lambda i: (0, 0),
                                  pipeline_mode=pl.Buffered(1))
        else:
            w2_spec = pl.BlockSpec((D, D), lambda i: (0, 0))
            p_spec = pl.BlockSpec((8, D), lambda i: (0, 0))
        return pl.pallas_call(
            kernel,
            out_shape=jax.ShapeDtypeStruct((N, D), out_dtype),
            grid_spec=pltpu.PrefetchScalarGridSpec(
                num_scalar_prefetch=0,
                grid=(pl.cdiv(N, tm),),
                in_specs=[
                    pl.BlockSpec((tm, 1), lambda i: (i, 0)),   # x column (ragged edge masked)
                    w2_spec,                                   # (in, out) weight, bf16
                    p_spec,                                    # packed parameter slab
                ],
                out_specs=pl.BlockSpec((tm, D), lambda i: (i, 0)),
            ),
            compiler_params=pltpu.CompilerParams(
                dimension_semantics=("parallel",),
                vmem_limit_bytes=int(vmem_limit)),
            cost_estimate=cost,
        )(x2, w2p, params)

    try:
        out = _call(True)
    except Exception:
        # Fallback for jax versions without single-buffer pipeline_mode support.
        out = _call(False)

    return out.reshape(B, S, D)


def _reference(x, w1, b1, w2, b2, gamma, beta, max_value=512.0, eps=1e-5,
               dot_dtype=jnp.bfloat16):
    """Pure-JAX reference mirroring the kernel's numeric policy (bf16 MXU
    inputs, f32 accumulation, f32 LayerNorm)."""
    xc = jnp.minimum(x[..., None], max_value)
    h = jax.nn.relu(xc * w1[None, None, :] + b1)
    y = jnp.dot(h.astype(dot_dtype), w2.astype(dot_dtype),
                preferred_element_type=jnp.float32) + b2
    mean = y.mean(-1, keepdims=True)
    var = ((y - mean) ** 2).mean(-1, keepdims=True)
    return (y - mean) * jax.lax.rsqrt(var + eps) * gamma + beta


if __name__ == "__main__":
    B, S, D = 2, 8, 32
    key = jax.random.PRNGKey(0)
    kx, k1, k2, k3, k4 = jax.random.split(key, 5)

    # Deterministic synthetic parameters (shapes per nn.Module __init__).
    x = jax.random.uniform(kx, (B, S), jnp.float32, minval=0.0, maxval=1000.0)
    w1 = jax.random.normal(k1, (D,), jnp.float32) * 0.5       # Linear(1, D).weight[:, 0]
    b1 = jax.random.normal(k2, (D,), jnp.float32) * 0.1
    w2 = jax.random.normal(k3, (D, D), jnp.float32) * (1.0 / jnp.sqrt(D))  # (in, out) = weight.T
    b2 = jax.random.normal(k4, (D,), jnp.float32) * 0.1
    gamma = jnp.ones((D,), jnp.float32)
    beta = jnp.zeros((D,), jnp.float32)

    # One-time parameter prep (hoisted out of the forward path).
    w2p, params = prepare_cve_params(w1, b1, w2, b2, gamma, beta)

    out = continuous_value_encoder(x, w2p, params)
    out = jax.block_until_ready(out)

    ref = _reference(x, w1, b1, w2, b2, gamma, beta)
    assert out.shape == (B, S, D)
    assert jnp.allclose(out, ref, atol=2e-3, rtol=2e-3), "mismatch vs reference"
    print("KERNEL_OK")
</pallas_src>

<mosaic_0001>
module attributes {stable_mosaic.version = 11 : i64} {
  func.func @_cve_kernel(%arg0: i32, %arg1: memref<8x1xf32, #tpu.memory_space<vmem>>, %arg2: memref<32x32xbf16, #tpu.memory_space<vmem>>, %arg3: memref<8x32xf32, #tpu.memory_space<vmem>>, %arg4: memref<8x32xf32, #tpu.memory_space<vmem>>) attributes {dimension_semantics = [#tpu.dimension_semantics<parallel>], iteration_bounds = array<i64: 2>, scalar_prefetch = 0 : i64, scratch_operands = 0 : i64, tpu.core_type = #tpu.core_type<tc>, window_params = [{transform_indices = @transform_0, window_bounds = array<i64: 8, 1>}, {pipeline_mode = #tpu.pipeline_mode<synchronous>, transform_indices = @transform_1, window_bounds = array<i64: 32, 32>}, {pipeline_mode = #tpu.pipeline_mode<synchronous>, transform_indices = @transform_2, window_bounds = array<i64: 8, 32>}, {transform_indices = @transform_3, window_bounds = array<i64: 8, 32>}]} {
    %c0 = arith.constant 0 : index
    %c0_0 = arith.constant 0 : index
    %0 = vector.load %arg3[%c0, %c0_0] : memref<8x32xf32, #tpu.memory_space<vmem>>, vector<1x32xf32>
    %c1 = arith.constant 1 : index
    %c0_1 = arith.constant 0 : index
    %1 = vector.load %arg3[%c1, %c0_1] : memref<8x32xf32, #tpu.memory_space<vmem>>, vector<1x32xf32>
    %c2 = arith.constant 2 : index
    %c0_2 = arith.constant 0 : index
    %2 = vector.load %arg3[%c2, %c0_2] : memref<8x32xf32, #tpu.memory_space<vmem>>, vector<1x32xf32>
    %c3 = arith.constant 3 : index
    %c0_3 = arith.constant 0 : index
    %3 = vector.load %arg3[%c3, %c0_3] : memref<8x32xf32, #tpu.memory_space<vmem>>, vector<1x32xf32>
    %c4 = arith.constant 4 : index
    %c0_4 = arith.constant 0 : index
    %4 = vector.load %arg3[%c4, %c0_4] : memref<8x32xf32, #tpu.memory_space<vmem>>, vector<1x32xf32>
    %c0_5 = arith.constant 0 : index
    %c0_6 = arith.constant 0 : index
    %5 = vector.load %arg1[%c0_5, %c0_6] : memref<8x1xf32, #tpu.memory_space<vmem>>, vector<8x1xf32>
    %cst = arith.constant 5.120000e+02 : f32
    %6 = vector.broadcast %cst : f32 to vector<8x1xf32>
    %7 = arith.minimumf %5, %6 : vector<8x1xf32>
    %8 = vector.broadcast %7 : vector<8x1xf32> to vector<8x32xf32>
    %9 = vector.broadcast %0 : vector<1x32xf32> to vector<8x32xf32>
    %10 = arith.mulf %8, %9 : vector<8x32xf32>
    %11 = vector.broadcast %1 : vector<1x32xf32> to vector<8x32xf32>
    %12 = arith.addf %10, %11 : vector<8x32xf32>
    %cst_7 = arith.constant 0.000000e+00 : f32
    %13 = vector.broadcast %cst_7 : f32 to vector<8x32xf32>
    %14 = arith.maximumf %12, %13 : vector<8x32xf32>
    %15 = arith.truncf %14 : vector<8x32xf32> to vector<8x32xbf16>
    %c0_8 = arith.constant 0 : index
    %c0_9 = arith.constant 0 : index
    %16 = vector.load %arg2[%c0_8, %c0_9] : memref<32x32xbf16, #tpu.memory_space<vmem>>, vector<32x32xbf16>
    %cst_10 = arith.constant dense<0.000000e+00> : vector<8x32xf32>
    %17 = tpu.matmul %15, %16, %cst_10 {dimension_numbers = #tpu.dot_dimension_numbers<[1], [0], [0], [1], [0, 0, 1, 1], [], []>} : vector<8x32xbf16>, vector<32x32xbf16>, vector<8x32xf32> -> vector<8x32xf32>
    %18 = vector.broadcast %2 : vector<1x32xf32> to vector<8x32xf32>
    %19 = arith.addf %17, %18 : vector<8x32xf32>
    %cst_11 = arith.constant dense<0.000000e+00> : vector<8xf32>
    %20 = vector.multi_reduction <add>, %19, %cst_11 [1] : vector<8x32xf32> to vector<8xf32>
    %21 = vector.shape_cast %20 : vector<8xf32> to vector<8x1xf32>
    %cst_12 = arith.constant 3.200000e+01 : f32
    %22 = vector.broadcast %cst_12 : f32 to vector<8x1xf32>
    %23 = arith.divf %21, %22 : vector<8x1xf32>
    %24 = vector.broadcast %23 : vector<8x1xf32> to vector<8x32xf32>
    %25 = arith.subf %19, %24 : vector<8x32xf32>
    %26 = arith.mulf %25, %25 : vector<8x32xf32>
    %cst_13 = arith.constant dense<0.000000e+00> : vector<8xf32>
    %27 = vector.multi_reduction <add>, %26, %cst_13 [1] : vector<8x32xf32> to vector<8xf32>
    %28 = vector.shape_cast %27 : vector<8xf32> to vector<8x1xf32>
    %cst_14 = arith.constant 3.200000e+01 : f32
    %29 = vector.broadcast %cst_14 : f32 to vector<8x1xf32>
    %30 = arith.divf %28, %29 : vector<8x1xf32>
    %cst_15 = arith.constant 9.99999974E-6 : f32
    %31 = vector.broadcast %cst_15 : f32 to vector<8x1xf32>
    %32 = arith.addf %30, %31 : vector<8x1xf32>
    %33 = math.rsqrt %32 : vector<8x1xf32>
    %34 = vector.broadcast %33 : vector<8x1xf32> to vector<8x32xf32>
    %35 = arith.mulf %25, %34 : vector<8x32xf32>
    %36 = vector.broadcast %3 : vector<1x32xf32> to vector<8x32xf32>
    %37 = arith.mulf %35, %36 : vector<8x32xf32>
    %38 = vector.broadcast %4 : vector<1x32xf32> to vector<8x32xf32>
    %39 = arith.addf %37, %38 : vector<8x32xf32>
    %c0_16 = arith.constant 0 : index
    %c0_17 = arith.constant 0 : index
    %40 = vector.load %arg4[%c0_16, %c0_17] : memref<8x32xf32, #tpu.memory_space<vmem>>, vector<8x32xf32>
    tpu.vector_store %arg4[%c0_16, %c0_17], %39 {strides = array<i32>} : memref<8x32xf32, #tpu.memory_space<vmem>>, vector<8x32xf32>,
    return
  }
  func.func @transform_0(%arg0: i32) -> (i32, i32) {
    %c0_i32 = arith.constant 0 : i32
    %c0_i32_0 = arith.constant 0 : i32
    return %arg0, %c0_i32 : i32, i32
  }
  func.func @transform_1(%arg0: i32) -> (i32, i32) {
    %c0_i32 = arith.constant 0 : i32
    %c0_i32_0 = arith.constant 0 : i32
    %c0_i32_1 = arith.constant 0 : i32
    return %c0_i32, %c0_i32_0 : i32, i32
  }
  func.func @transform_2(%arg0: i32) -> (i32, i32) {
    %c0_i32 = arith.constant 0 : i32
    %c0_i32_0 = arith.constant 0 : i32
    %c0_i32_1 = arith.constant 0 : i32
    return %c0_i32, %c0_i32_0 : i32, i32
  }
  func.func @transform_3(%arg0: i32) -> (i32, i32) {
    %c0_i32 = arith.constant 0 : i32
    %c0_i32_0 = arith.constant 0 : i32
    return %arg0, %c0_i32 : i32, i32
  }
}

module attributes {stable_mosaic.version = 11 : i64} {
  func.func @_cve_kernel(%arg0: i32, %arg1: memref<8x1xf32, #tpu.memory_space<vmem>>, %arg2: memref<32x32xbf16, #tpu.memory_space<vmem>>, %arg3: memref<8x32xf32, #tpu.memory_space<vmem>>, %arg4: memref<8x32xf32, #tpu.memory_space<vmem>>) attributes {dimension_semantics = [#tpu.dimension_semantics<parallel>], iteration_bounds = array<i64: 2>, scalar_prefetch = 0 : i64, scratch_operands = 0 : i64, tpu.core_type = #tpu.core_type<tc>, window_params = [{transform_indices = @transform_0, window_bounds = array<i64: 8, 1>}, {pipeline_mode = #tpu.pipeline_mode<synchronous>, transform_indices = @transform_1, window_bounds = array<i64: 32, 32>}, {pipeline_mode = #tpu.pipeline_mode<synchronous>, transform_indices = @transform_2, window_bounds = array<i64: 8, 32>}, {transform_indices = @transform_3, window_bounds = array<i64: 8, 32>}]} {
    %c0 = arith.constant 0 : index
    %c0_0 = arith.constant 0 : index
    %0 = vector.load %arg3[%c0, %c0_0] : memref<8x32xf32, #tpu.memory_space<vmem>>, vector<1x32xf32>
    %c1 = arith.constant 1 : index
    %c0_1 = arith.constant 0 : index
    %1 = vector.load %arg3[%c1, %c0_1] : memref<8x32xf32, #tpu.memory_space<vmem>>, vector<1x32xf32>
    %c2 = arith.constant 2 : index
    %c0_2 = arith.constant 0 : index
    %2 = vector.load %arg3[%c2, %c0_2] : memref<8x32xf32, #tpu.memory_space<vmem>>, vector<1x32xf32>
    %c3 = arith.constant 3 : index
    %c0_3 = arith.constant 0 : index
    %3 = vector.load %arg3[%c3, %c0_3] : memref<8x32xf32, #tpu.memory_space<vmem>>, vector<1x32xf32>
    %c4 = arith.constant 4 : index
    %c0_4 = arith.constant 0 : index
    %4 = vector.load %arg3[%c4, %c0_4] : memref<8x32xf32, #tpu.memory_space<vmem>>, vector<1x32xf32>
    %c0_5 = arith.constant 0 : index
    %c0_6 = arith.constant 0 : index
    %5 = vector.load %arg1[%c0_5, %c0_6] : memref<8x1xf32, #tpu.memory_space<vmem>>, vector<8x1xf32>
    %cst = arith.constant 5.120000e+02 : f32
    %6 = vector.broadcast %cst : f32 to vector<8x1xf32>
    %7 = arith.minimumf %5, %6 : vector<8x1xf32>
    %8 = vector.broadcast %7 : vector<8x1xf32> to vector<8x32xf32>
    %9 = vector.broadcast %0 : vector<1x32xf32> to vector<8x32xf32>
    %10 = arith.mulf %8, %9 : vector<8x32xf32>
    %11 = vector.broadcast %1 : vector<1x32xf32> to vector<8x32xf32>
    %12 = arith.addf %10, %11 : vector<8x32xf32>
    %cst_7 = arith.constant 0.000000e+00 : f32
    %13 = vector.broadcast %cst_7 : f32 to vector<8x32xf32>
    %14 = arith.maximumf %12, %13 : vector<8x32xf32>
    %15 = arith.truncf %14 : vector<8x32xf32> to vector<8x32xbf16>
    %c0_8 = arith.constant 0 : index
    %c0_9 = arith.constant 0 : index
    %16 = vector.load %arg2[%c0_8, %c0_9] : memref<32x32xbf16, #tpu.memory_space<vmem>>, vector<32x32xbf16>
    %cst_10 = arith.constant dense<0.000000e+00> : vector<8x32xf32>
    %17 = tpu.matmul %15, %16, %cst_10 {dimension_numbers = #tpu.dot_dimension_numbers<[1], [0], [0], [1], [0, 0, 1, 1], [], []>} : vector<8x32xbf16>, vector<32x32xbf16>, vector<8x32xf32> -> vector<8x32xf32>
    %18 = vector.broadcast %2 : vector<1x32xf32> to vector<8x32xf32>
    %19 = arith.addf %17, %18 : vector<8x32xf32>
    %cst_11 = arith.constant dense<0.000000e+00> : vector<8xf32>
    %20 = vector.multi_reduction <add>, %19, %cst_11 [1] : vector<8x32xf32> to vector<8xf32>
    %21 = vector.shape_cast %20 : vector<8xf32> to vector<8x1xf32>
    %cst_12 = arith.constant 3.200000e+01 : f32
    %22 = vector.broadcast %cst_12 : f32 to vector<8x1xf32>
    %23 = arith.divf %21, %22 : vector<8x1xf32>
    %24 = vector.broadcast %23 : vector<8x1xf32> to vector<8x32xf32>
    %25 = arith.subf %19, %24 : vector<8x32xf32>
    %26 = arith.mulf %25, %25 : vector<8x32xf32>
    %cst_13 = arith.constant dense<0.000000e+00> : vector<8xf32>
    %27 = vector.multi_reduction <add>, %26, %cst_13 [1] : vector<8x32xf32> to vector<8xf32>
    %28 = vector.shape_cast %27 : vector<8xf32> to vector<8x1xf32>
    %cst_14 = arith.constant 3.200000e+01 : f32
    %29 = vector.broadcast %cst_14 : f32 to vector<8x1xf32>
    %30 = arith.divf %28, %29 : vector<8x1xf32>
    %cst_15 = arith.constant 9.99999974E-6 : f32
    %31 = vector.broadcast %cst_15 : f32 to vector<8x1xf32>
    %32 = arith.addf %30, %31 : vector<8x1xf32>
    %33 = math.rsqrt %32 : vector<8x1xf32>
    %34 = vector.broadcast %33 : vector<8x1xf32> to vector<8x32xf32>
    %35 = arith.mulf %25, %34 : vector<8x32xf32>
    %36 = vector.broadcast %3 : vector<1x32xf32> to vector<8x32xf32>
    %37 = arith.mulf %35, %36 : vector<8x32xf32>
    %38 = vector.broadcast %4 : vector<1x32xf32> to vector<8x32xf32>
    %39 = arith.addf %37, %38 : vector<8x32xf32>
    %c0_16 = arith.constant 0 : index
    %c0_17 = arith.constant 0 : index
    %40 = vector.load %arg4[%c0_16, %c0_17] : memref<8x32xf32, #tpu.memory_space<vmem>>, vector<8x32xf32>
    tpu.vector_store %arg4[%c0_16, %c0_17], %39 {strides = array<i32>} : memref<8x32xf32, #tpu.memory_space<vmem>>, vector<8x32xf32>,
    return
  }
  func.func @transform_0(%arg0: i32) -> (i32, i32) {
    %c0_i32 = arith.constant 0 : i32
    %c0_i32_0 = arith.constant 0 : i32
    return %arg0, %c0_i32 : i32, i32
  }
  func.func @transform_1(%arg0: i32) -> (i32, i32) {
    %c0_i32 = arith.constant 0 : i32
    %c0_i32_0 = arith.constant 0 : i32
    %c0_i32_1 = arith.constant 0 : i32
    return %c0_i32, %c0_i32_0 : i32, i32
  }
  func.func @transform_2(%arg0: i32) -> (i32, i32) {
    %c0_i32 = arith.constant 0 : i32
    %c0_i32_0 = arith.constant 0 : i32
    %c0_i32_1 = arith.constant 0 : i32
    return %c0_i32, %c0_i32_0 : i32, i32
  }
  func.func @transform_3(%arg0: i32) -> (i32, i32) {
    %c0_i32 = arith.constant 0 : i32
    %c0_i32_0 = arith.constant 0 : i32
    return %arg0, %c0_i32 : i32, i32
  }
}

</mosaic_0001>

<llo_original>
// kernel: tpu_custom_call.1
$region0: #{tpu_custom_call.1}
  #allocation0 [shape = 'u32[]', space=smem, size = 0x4, offset = 0x4, fixed_abs, tag = 'smem constant byte address 0x4 - core index']
  #allocation1 [shape = 'u32[144,128]{1,0:T(1,128)}', space=vmem, size = 0x12000, scoped, tag = 'internal scratch']
  %s0 = inlined_call_operand.vmem [shape: f32[16,1], index: 0, kind: input, shape index: {}]
  %s1 = inlined_call_operand.vmem [shape: bf16[32,32], index: 1, kind: input, shape index: {}]
  %s2 = inlined_call_operand.hbm [shape: f32[8,32], index: 2, kind: input, shape index: {}]
  %s3 = inlined_call_operand.hbm [shape: f32[16,32], index: 3, kind: output, shape index: {}]
  %s4 = sld [smem:[#allocation0]]
  $region49: #{tpu_custom_call.1} parent=0
    _
  %s6 = ssub.s32 1, %s4
  %s7 = scalar_select 0, %s6, %s4
  $region1: #{tpu_custom_call.1} parent=0
    #allocation2 [shape = 'u8[4096]{0}', space=vmem, size = 0x1000, scoped, tag = 'input window, operand 2, single buffered']
    #allocation3 [shape = 's32[2]{0}', space=sflag, size = 0x8, scoped, tag = 'scoped memory for tpu_custom_call.1']
    #allocation4 [shape = 's32[2]{0}', space=sflag, size = 0x8, scoped, tag = 'scoped memory for tpu_custom_call.1']
    #allocation5 [shape = 'u8[8192]{0}', space=vmem, size = 0x2000, scoped, tag = 'output window, operand 0']
    %8 = vsyncpa [#allocation3], 0
    %9 = vsyncpa [#allocation4], 0
    %s10 = scalar_lea.sflag [#allocation4], 1
    %11 = vsyncpa %s10, 0
    loop: start=0, step=1, limit=4
    $region2: #{tpu_custom_call.1} parent=1 // loop_pre_header
      _
    $region3: #{tpu_custom_call.1} parent=1 // loop_header
      %s13 = sphi 0, %s17
      %p14 = scmp.ge.s32.totalorder %s13, 4
      %s23 = sphi 0, %s25
      %s26 = sphi 0, %s23
      %s27 = sphi 0, %s26
      %s43 = sphi 0, %s27
      %s47 = sphi 0, %s47
      %s49 = sphi 0, %s47
      %s50 = sphi 0, %s49
      %s64 = sphi 0, %s50
      %s68 = sphi 0, %s68
      %s70 = sphi 0, %s68
      %s71 = sphi 0, %s70
      %s85 = sphi 0, %s71
      %s91 = sphi 0, %s93
      %s94 = sphi 0, %s91
      %s95 = sphi 0, %s94
      %s111 = sphi 0, %s95
    $region4: #{tpu_custom_call.1} parent=1 // loop_header_branch
      %16 = sbr.rel (%p14) target = $region8
    $region5: #{tpu_custom_call.1} parent=1 // loop_body
      %s18 = ssub.s32 %s13, 1
      %s19 = ssub.s32 %s13, 2
      %s20 = sadd.s32 %s13, 1
      %s21 = ssub.s32 %s13, %s20
      %p22 = scmp.eq.s32.totalorder %s21, 0
      %s24 = sadd.s32 %s23, 1
      %s25 = scalar_select %p22, %s23, %s24
      %p28 = pneg %p22
      %p29 = scmp.eq.s32.totalorder %s13, 1
      %p30 = por %p28, %p29
      %p31 = scmp.ne.s32.totalorder %s23, %s26
      %p32 = scmp.eq.s32.totalorder %s13, 0
      %p33 = por %p31, %p32
      %p34 = scmp.ne.s32.totalorder %s23, %s26
      %p35 = scmp.eq.s32.totalorder %s18, 1
      %p36 = por %p34, %p35
      %p37 = scmp.ne.s32.totalorder %s26, %s27
      %p38 = scmp.eq.s32.totalorder %s18, 0
      %p39 = por %p37, %p38
      %p40 = scmp.ne.s32.totalorder %s26, %s27
      %p41 = scmp.eq.s32.totalorder %s19, 1
      %p42 = por %p40, %p41
      %p44 = scmp.ne.s32.totalorder %s27, %s43
      %p45 = scmp.eq.s32.totalorder %s19, 0
      %p46 = por %p44, %p45
      %s48 = sadd.s32 %s47, 1
      %p51 = scmp.eq.s32.totalorder %s13, 1
      %p52 = scmp.ne.s32.totalorder %s47, %s49
      %p53 = scmp.eq.s32.totalorder %s13, 0
      %p54 = por %p52, %p53
      %p55 = scmp.ne.s32.totalorder %s47, %s49
      %p56 = scmp.eq.s32.totalorder %s18, 1
      %p57 = por %p55, %p56
      %p58 = scmp.ne.s32.totalorder %s49, %s50
      %p59 = scmp.eq.s32.totalorder %s18, 0
      %p60 = por %p58, %p59
      %p61 = scmp.ne.s32.totalorder %s49, %s50
      %p62 = scmp.eq.s32.totalorder %s19, 1
      %p63 = por %p61, %p62
      %p65 = scmp.ne.s32.totalorder %s50, %s64
      %p66 = scmp.eq.s32.totalorder %s19, 0
      %p67 = por %p65, %p66
      %s69 = sadd.s32 %s68, 1
      %p72 = scmp.eq.s32.totalorder %s13, 1
      %p73 = scmp.ne.s32.totalorder %s68, %s70
      %p74 = scmp.eq.s32.totalorder %s13, 0
      %p75 = por %p73, %p74
      %p76 = scmp.ne.s32.totalorder %s68, %s70
      %p77 = scmp.eq.s32.totalorder %s18, 1
      %p78 = por %p76, %p77
      %p79 = scmp.ne.s32.totalorder %s70, %s71
      %p80 = scmp.eq.s32.totalorder %s18, 0
      %p81 = por %p79, %p80
      %p82 = scmp.ne.s32.totalorder %s70, %s71
      %p83 = scmp.eq.s32.totalorder %s19, 1
      %p84 = por %p82, %p83
      %p86 = scmp.ne.s32.totalorder %s71, %s85
      %p87 = scmp.eq.s32.totalorder %s19, 0
      %p88 = por %p86, %p87
      %s89 = ssub.s32 %s13, %s20
      %p90 = scmp.eq.s32.totalorder %s89, 0
      %s92 = sadd.s32 %s91, 1
      %s93 = scalar_select %p90, %s91, %s92
      %p96 = pneg %p90
      %p97 = scmp.eq.s32.totalorder %s13, 1
      %p98 = por %p96, %p97
      %p99 = scmp.ne.s32.totalorder %s91, %s94
      %p100 = scmp.eq.s32.totalorder %s13, 0
      %p101 = por %p99, %p100
      %p102 = scmp.ne.s32.totalorder %s91, %s94
      %p103 = scmp.eq.s32.totalorder %s18, 1
      %p104 = por %p102, %p103
      %p105 = scmp.ne.s32.totalorder %s94, %s95
      %p106 = scmp.eq.s32.totalorder %s18, 0
      %p107 = por %p105, %p106
      %p108 = scmp.ne.s32.totalorder %s94, %s95
      %p109 = scmp.eq.s32.totalorder %s19, 1
      %p110 = por %p108, %p109
      %p112 = scmp.ne.s32.totalorder %s95, %s111
      %p113 = scmp.eq.s32.totalorder %s19, 0
      %p114 = por %p112, %p113
      %p115 = scmp.le.s32.totalorder 1, %s13
      %p116 = scmp.lt.s32.totalorder %s13, 3
      %p117 = pnand %p115, %p116
      %p118 = pneg %p117
      // Predicated region
      $region9: #{tpu_custom_call.1} parent=5 // pred_check
        _
      $region10: #{tpu_custom_call.1} parent=5 // pred_check_branch
        %120 = sbr.rel (%p117) target = $region12
      $region11: #{tpu_custom_call.1} parent=5 // pred_region
        %s121 = ssub.s32 %s13, 1
        // Predicated region
        $region13: #{tpu_custom_call.1} parent=11 // pred_check
          %p122 = pneg %p60
        $region14: #{tpu_custom_call.1} parent=11 // pred_check_branch
          %124 = sbr.rel (%p122) target = $region16
        $region15: #{tpu_custom_call.1} parent=11 // pred_region
          _
        $region16: #{tpu_custom_call.1} parent=11 // pred_fallthru
          _
        // Predicated region
        $region17: #{tpu_custom_call.1} parent=11 // pred_check
          %p125 = pneg %p81
        $region18: #{tpu_custom_call.1} parent=11 // pred_check_branch
          %127 = sbr.rel (%p125) target = $region20
        $region19: #{tpu_custom_call.1} parent=11 // pred_region
          %s129 = ssub.s32 128, 128
          %130 = vsyncadd [#allocation3], %s129
          %s132 = sshll.u32 [#allocation2], 4
          %s133 = int_to_ptr.vmem [resolvable:$true] %s132
          %135 = dma.hbm_to_vmem [thread:$0]  %s2, 128, %s133, [#allocation3]
        $region20: #{tpu_custom_call.1} parent=11 // pred_fallthru
          _
      $region12: #{tpu_custom_call.1} parent=5 // pred_fallthru
        _
      %p136 = scmp.lt.s32.totalorder %s13, 2
      // Predicated region
      $region21: #{tpu_custom_call.1} parent=5 // pred_check
        %p137 = pneg %p136
      $region22: #{tpu_custom_call.1} parent=5 // pred_check_branch
        %139 = sbr.rel (%p137) target = $region24
      $region23: #{tpu_custom_call.1} parent=5 // pred_region
        // Predicated region
        $region25: #{tpu_custom_call.1} parent=23 // pred_check
          %p140 = pneg %p33
        $region26: #{tpu_custom_call.1} parent=23 // pred_check_branch
          %142 = sbr.rel (%p140) target = $region28
        $region27: #{tpu_custom_call.1} parent=23 // pred_region
          %p143 = scmp.lt.s32.totalorder %s13, 1
          %s144 = scalar_select %p143, %s13, 1
          %s145 = smul.addr %s144, 8
          %s146 = scalar_lea.vmem %s0, %s145
        $region28: #{tpu_custom_call.1} parent=23 // pred_fallthru
          _
      $region24: #{tpu_custom_call.1} parent=5 // pred_fallthru
        _
      %p147 = scmp.le.s32.totalorder 1, %s13
      %p148 = scmp.lt.s32.totalorder %s13, 3
      %p149 = pnand %p147, %p148
      %p150 = pneg %p149
      // Predicated region
      $region29: #{tpu_custom_call.1} parent=5 // pred_check
        _
      $region30: #{tpu_custom_call.1} parent=5 // pred_check_branch
        %152 = sbr.rel (%p149) target = $region32
      $region31: #{tpu_custom_call.1} parent=5 // pred_region
        %s153 = ssub.s32 %s13, 1
        // Predicated region
        $region33: #{tpu_custom_call.1} parent=31 // pred_check
          %p154 = pneg %p81
        $region34: #{tpu_custom_call.1} parent=31 // pred_check_branch
          %156 = sbr.rel (%p154) target = $region36
        $region35: #{tpu_custom_call.1} parent=31 // pred_region
          %157 = dma.done [#allocation3], 128
        $region36: #{tpu_custom_call.1} parent=31 // pred_fallthru
          _
        %p158 = scmp.lt.s32.totalorder %s18, 1
        %s159 = scalar_select %p158, %s18, 1
        %s160 = smul.addr %s159, 8
        %s161 = scalar_lea.vmem %s0, %s160
        %p162 = pneg %p39
        %p163 = pneg %p36
        %p164 = pneg %p60
        %p165 = pneg %p57
        %p166 = pneg %p81
        %p167 = pneg %p78
        %p168 = pneg %p107
        %p169 = pneg %p104
        %s170 = sand.u32 %s94, 1
        %s171 = scalar_lea.sflag [#allocation4], %s170
        %s172 = sand.u32 %s94, 1
        %s173 = smul.addr %s172, 8
        %s174 = scalar_lea.vmem [#allocation5], %s173
        %p175 = scmp.lt.s32.totalorder %s18, 1
        %s176 = scalar_select %p175, %s18, 1
        %s177 = smul.addr %s176, 8
        %s178 = scalar_lea.vmem %s0, %s177
        %v180 = vld [vmem:[#allocation2] sm:$0x1]
        %v181 = vld [vmem:[#allocation2 + $0x1] sm:$0x1]
        %v182 = vld [vmem:[#allocation2 + $0x2] sm:$0x1]
        %v183 = vld [vmem:[#allocation2 + $0x3] sm:$0x1]
        %v184 = vld [vmem:[#allocation2 + $0x4] sm:$0x1]
        %v185 = vld [vmem:[%s178] sm:$0xff]
        %v186 = vmin.f32 %v185, 512.0
        %188 = vset.pattern.permute.xlu0 0
        %189 = vperm.xlu0 %188, %v186
        %v190 = vpop.permute.xlu0 %189
        %v192 = vlaneseq
        %v193 = vshrl.u32 %v192, 7
        %v194 = vsub.s32 0, %v193
        %v195 = vrot.slane %v180, %v194
        %v196 = vmul.f32 %v190, %v195
        %v197 = vlaneseq
        %v198 = vshrl.u32 %v197, 7
        %v199 = vsub.s32 0, %v198
        %v200 = vrot.slane %v181, %v199
        %v201 = vadd.f32 %v196, %v200
        %v202 = vmax.f32 %v201, 0.0
        %v203 = vpack.c.bf16 %v202, %v202
        %v204 = vld [vmem:[%s1] sm:$0xf]
        %v205 = vld [vmem:[%s1 + $0x4] sm:$0xf]
        %v206 = vld [vmem:[%s1 + $0x8] sm:$0xf]
        %v207 = vld [vmem:[%s1 + $0xc] sm:$0xf]
        %v208 = vlaneseq
        %v209 = vshrl.u32 %v208, 7
        %v210 = vsub.s32 0, %v209
        %v211 = vrot.slane %v182, %v210
        %v216 = vunpack.c.l.b16 %v204
        %v217 = vunpack.c.l.b16 %v205
        %v218 = vunpack.c.l.b16 %v206
        %v219 = vunpack.c.l.b16 %v207
        %v220 = vpack.c.b16 %v217, %v216
        %v221 = vpack.c.b16 %v219, %v218
        %vm224 = vcmask 261120
        %v226 = vsel %vm224, %v203, 0
        %228 = vmatprep.subr.bf16.mxu0 0
        %229 = vmatpush1.bf16.msra.mxu0 0
        %230 = vmatprep.subr.bf16.mxu0 0
        %231 = vmatpush1.bf16.msra.mxu0 0
        %232 = vmatprep.subr.bf16.mxu0 0
        %233 = vmatpush1.bf16.msra.mxu0 0
        %234 = vmatprep.subr.bf16.mxu0 0
        %235 = vmatpush1.bf16.msra.mxu0 0
        %236 = vmatprep.subr.bf16.mxu0 0
        %237 = vmatpush1.bf16.msra.mxu0 0
        %238 = vmatprep.subr.bf16.mxu0 0
        %239 = vmatpush1.bf16.msra.mxu0 0
        %240 = vmatprep.subr.bf16.mxu0 0
        %241 = vmatpush1.bf16.msra.mxu0 %v221
        %242 = vmatprep.subr.bf16.mxu0 0
        %243 = vmatpush1.bf16.msra.mxu0 %v220
        %244 = vmatprep.subr.bf16.mxu0 0
        %245 = vmatpush2.bf16.msra.mxu0 0
        %246 = vmatprep.subr.bf16.mxu0 0
        %247 = vmatpush2.bf16.msra.mxu0 0
        %248 = vmatprep.subr.bf16.mxu0 0
        %249 = vmatpush2.bf16.msra.mxu0 0
        %250 = vmatprep.subr.bf16.mxu0 0
        %251 = vmatpush2.bf16.msra.mxu0 0
        %252 = vmatprep.subr.bf16.mxu0 0
        %253 = vmatpush2.bf16.msra.mxu0 0
        %254 = vmatprep.subr.bf16.mxu0 0
        %255 = vmatpush2.bf16.msra.mxu0 0
        %256 = vmatprep.subr.bf16.mxu0 0
        %257 = vmatpush2.bf16.msra.mxu0 0
        %258 = vmatprep.subr.bf16.mxu0 0
        %259 = vmatpush2.bf16.msra.mxu0 0
        %260 = vmatprep.mubr.bf16.mxu0 0
        %261 = vmatmul.mubr.bf16.gmra.mxu0 %v226
        %v262 = vpop.f32.mrf.mxu0
        %v263 = vadd.f32 %v211, %v262
        %v264 = vpop.f32.mrf.mxu0
        %v265 = vpop.f32.mrf.mxu0
        %v266 = vpop.f32.mrf.mxu0
        %267 = vdwg.mxu0
        %v268 = vsel %vm224, %v263, 0.0
        %269 = vadd.xlane.f32.xlu0 %v268
        %v270 = vpop.xlane.xlu0 %269
        %v271 = vrcp.pop 32.0
        %v272 = vmul.f32 %v270, %v271
        %v273 = vsub.f32 %v263, %v272
        %v274 = vmul.f32 %v273, %v273
        %v275 = vsel %vm224, %v274, 0.0
        %276 = vadd.xlane.f32.xlu0 %v275
        %v277 = vpop.xlane.xlu0 %276
        %v278 = vmul.f32 %v277, %v271
        %v279 = vadd.f32 %v278, 1e-05
        %v280 = vrsqrt.pop %v279
        %v281 = vmul.f32 %v273, %v280
        %v282 = vlaneseq
        %v283 = vshrl.u32 %v282, 7
        %v284 = vsub.s32 0, %v283
        %v285 = vrot.slane %v183, %v284
        %v286 = vmul.f32 %v281, %v285
        %v287 = vlaneseq
        %v288 = vshrl.u32 %v287, 7
        %v289 = vsub.s32 0, %v288
        %v290 = vrot.slane %v184, %v289
        %v291 = vadd.f32 %v286, %v290
        %292 = vst.msk [vmem:[%s174] sm:$0xff] %vm224, %v291
        %s293 = sand.u32 %s94, 1
        %s294 = scalar_lea.sflag [#allocation4], %s293
        %s295 = sand.u32 %s94, 1
        %s296 = smul.addr %s295, 8
        %s297 = scalar_lea.vmem [#allocation5], %s296
        // Predicated region
        $region37: #{tpu_custom_call.1} parent=31 // pred_check
          %p298 = pneg %p104
        $region38: #{tpu_custom_call.1} parent=31 // pred_check_branch
          %300 = sbr.rel (%p298) target = $region40
        $region39: #{tpu_custom_call.1} parent=31 // pred_region
          %s302 = ssub.s32 128, 128
          %303 = vsyncadd %s294, %s302
          %s304 = smul.addr %s18, 128
          %s305 = scalar_lea.hbm %s3, %s304
          %s307 = sshll.u32 %s297, 4
          %s308 = int_to_ptr.vmem [resolvable:$true] %s307
          %310 = dma.vmem_to_hbm [thread:$0]  %s308, 128, %s305, %s294
        $region40: #{tpu_custom_call.1} parent=31 // pred_fallthru
          _
      $region32: #{tpu_custom_call.1} parent=5 // pred_fallthru
        _
      %p311 = scmp.le.s32.totalorder 2, %s13
      // Predicated region
      $region41: #{tpu_custom_call.1} parent=5 // pred_check
        %p312 = pneg %p311
      $region42: #{tpu_custom_call.1} parent=5 // pred_check_branch
        %314 = sbr.rel (%p312) target = $region44
      $region43: #{tpu_custom_call.1} parent=5 // pred_region
        %s315 = ssub.s32 %s13, 2
        // Predicated region
        $region45: #{tpu_custom_call.1} parent=43 // pred_check
          %p316 = pneg %p110
        $region46: #{tpu_custom_call.1} parent=43 // pred_check_branch
          %318 = sbr.rel (%p316) target = $region48
        $region47: #{tpu_custom_call.1} parent=43 // pred_region
          %s319 = sand.u32 %s95, 1
          %s320 = scalar_lea.sflag [#allocation4], %s319
          %s321 = sand.u32 %s95, 1
          %s322 = smul.addr %s321, 8
          %s323 = scalar_lea.vmem [#allocation5], %s322
          %324 = dma.done %s320, 128
        $region48: #{tpu_custom_call.1} parent=43 // pred_fallthru
          _
      $region44: #{tpu_custom_call.1} parent=5 // pred_fallthru
        _
    $region6: #{tpu_custom_call.1} parent=1 // loop_footer
      %s17 = sadd.s32 1, %s13
    $region7: #{tpu_custom_call.1} parent=1 // loop_footer_branch
      %12 = sbr.rel target = $region3
    $region8: #{tpu_custom_call.1} parent=1 // loop_exit
      _
    %325 = vsyncpa [#allocation3], 1
    %s326 = scalar_lea.sflag [#allocation3], 1
    %327 = vsyncpa %s326, 1
    %328 = vsyncpa [#allocation4], 1
    %s329 = scalar_lea.sflag [#allocation4], 1
    %330 = vsyncpa %s329, 1

// kernel: tpu_custom_call.1
$region0: #{tpu_custom_call.1}
  #allocation0 [shape = 'u32[]', space=smem, size = 0x4, offset = 0x4, fixed_abs, tag = 'smem constant byte address 0x4 - core index']
  #allocation1 [shape = 'u32[144,128]{1,0:T(1,128)}', space=vmem, size = 0x12000, scoped, tag = 'internal scratch']
  %s0 = inlined_call_operand.vmem [shape: f32[16,1], index: 0, kind: input, shape index: {}]
  %s1 = inlined_call_operand.vmem [shape: bf16[32,32], index: 1, kind: input, shape index: {}]
  %s2 = inlined_call_operand.hbm [shape: f32[8,32], index: 2, kind: input, shape index: {}]
  %s3 = inlined_call_operand.hbm [shape: f32[16,32], index: 3, kind: output, shape index: {}]
  %s4 = sld [smem:[#allocation0]]
  $region49: #{tpu_custom_call.1} parent=0
    _
  %s6 = ssub.s32 1, %s4
  %s7 = scalar_select 0, %s6, %s4
  $region1: #{tpu_custom_call.1} parent=0
    #allocation2 [shape = 'u8[4096]{0}', space=vmem, size = 0x1000, scoped, tag = 'input window, operand 2, single buffered']
    #allocation3 [shape = 's32[2]{0}', space=sflag, size = 0x8, scoped, tag = 'scoped memory for tpu_custom_call.1']
    #allocation4 [shape = 's32[2]{0}', space=sflag, size = 0x8, scoped, tag = 'scoped memory for tpu_custom_call.1']
    #allocation5 [shape = 'u8[8192]{0}', space=vmem, size = 0x2000, scoped, tag = 'output window, operand 0']
    %8 = vsyncpa [#allocation3], 0
    %9 = vsyncpa [#allocation4], 0
    %s10 = scalar_lea.sflag [#allocation4], 1
    %11 = vsyncpa %s10, 0
    loop: start=0, step=1, limit=4
    $region2: #{tpu_custom_call.1} parent=1 // loop_pre_header
      _
    $region3: #{tpu_custom_call.1} parent=1 // loop_header
      %s13 = sphi 0, %s17
      %p14 = scmp.ge.s32.totalorder %s13, 4
      %s23 = sphi 0, %s25
      %s26 = sphi 0, %s23
      %s27 = sphi 0, %s26
      %s43 = sphi 0, %s27
      %s47 = sphi 0, %s47
      %s49 = sphi 0, %s47
      %s50 = sphi 0, %s49
      %s64 = sphi 0, %s50
      %s68 = sphi 0, %s68
      %s70 = sphi 0, %s68
      %s71 = sphi 0, %s70
      %s85 = sphi 0, %s71
      %s91 = sphi 0, %s93
      %s94 = sphi 0, %s91
      %s95 = sphi 0, %s94
      %s111 = sphi 0, %s95
    $region4: #{tpu_custom_call.1} parent=1 // loop_header_branch
      %16 = sbr.rel (%p14) target = $region8
    $region5: #{tpu_custom_call.1} parent=1 // loop_body
      %s18 = ssub.s32 %s13, 1
      %s19 = ssub.s32 %s13, 2
      %s20 = sadd.s32 %s13, 1
      %s21 = ssub.s32 %s13, %s20
      %p22 = scmp.eq.s32.totalorder %s21, 0
      %s24 = sadd.s32 %s23, 1
      %s25 = scalar_select %p22, %s23, %s24
      %p28 = pneg %p22
      %p29 = scmp.eq.s32.totalorder %s13, 1
      %p30 = por %p28, %p29
      %p31 = scmp.ne.s32.totalorder %s23, %s26
      %p32 = scmp.eq.s32.totalorder %s13, 0
      %p33 = por %p31, %p32
      %p34 = scmp.ne.s32.totalorder %s23, %s26
      %p35 = scmp.eq.s32.totalorder %s18, 1
      %p36 = por %p34, %p35
      %p37 = scmp.ne.s32.totalorder %s26, %s27
      %p38 = scmp.eq.s32.totalorder %s18, 0
      %p39 = por %p37, %p38
      %p40 = scmp.ne.s32.totalorder %s26, %s27
      %p41 = scmp.eq.s32.totalorder %s19, 1
      %p42 = por %p40, %p41
      %p44 = scmp.ne.s32.totalorder %s27, %s43
      %p45 = scmp.eq.s32.totalorder %s19, 0
      %p46 = por %p44, %p45
      %s48 = sadd.s32 %s47, 1
      %p51 = scmp.eq.s32.totalorder %s13, 1
      %p52 = scmp.ne.s32.totalorder %s47, %s49
      %p53 = scmp.eq.s32.totalorder %s13, 0
      %p54 = por %p52, %p53
      %p55 = scmp.ne.s32.totalorder %s47, %s49
      %p56 = scmp.eq.s32.totalorder %s18, 1
      %p57 = por %p55, %p56
      %p58 = scmp.ne.s32.totalorder %s49, %s50
      %p59 = scmp.eq.s32.totalorder %s18, 0
      %p60 = por %p58, %p59
      %p61 = scmp.ne.s32.totalorder %s49, %s50
      %p62 = scmp.eq.s32.totalorder %s19, 1
      %p63 = por %p61, %p62
      %p65 = scmp.ne.s32.totalorder %s50, %s64
      %p66 = scmp.eq.s32.totalorder %s19, 0
      %p67 = por %p65, %p66
      %s69 = sadd.s32 %s68, 1
      %p72 = scmp.eq.s32.totalorder %s13, 1
      %p73 = scmp.ne.s32.totalorder %s68, %s70
      %p74 = scmp.eq.s32.totalorder %s13, 0
      %p75 = por %p73, %p74
      %p76 = scmp.ne.s32.totalorder %s68, %s70
      %p77 = scmp.eq.s32.totalorder %s18, 1
      %p78 = por %p76, %p77
      %p79 = scmp.ne.s32.totalorder %s70, %s71
      %p80 = scmp.eq.s32.totalorder %s18, 0
      %p81 = por %p79, %p80
      %p82 = scmp.ne.s32.totalorder %s70, %s71
      %p83 = scmp.eq.s32.totalorder %s19, 1
      %p84 = por %p82, %p83
      %p86 = scmp.ne.s32.totalorder %s71, %s85
      %p87 = scmp.eq.s32.totalorder %s19, 0
      %p88 = por %p86, %p87
      %s89 = ssub.s32 %s13, %s20
      %p90 = scmp.eq.s32.totalorder %s89, 0
      %s92 = sadd.s32 %s91, 1
      %s93 = scalar_select %p90, %s91, %s92
      %p96 = pneg %p90
      %p97 = scmp.eq.s32.totalorder %s13, 1
      %p98 = por %p96, %p97
      %p99 = scmp.ne.s32.totalorder %s91, %s94
      %p100 = scmp.eq.s32.totalorder %s13, 0
      %p101 = por %p99, %p100
      %p102 = scmp.ne.s32.totalorder %s91, %s94
      %p103 = scmp.eq.s32.totalorder %s18, 1
      %p104 = por %p102, %p103
      %p105 = scmp.ne.s32.totalorder %s94, %s95
      %p106 = scmp.eq.s32.totalorder %s18, 0
      %p107 = por %p105, %p106
      %p108 = scmp.ne.s32.totalorder %s94, %s95
      %p109 = scmp.eq.s32.totalorder %s19, 1
      %p110 = por %p108, %p109
      %p112 = scmp.ne.s32.totalorder %s95, %s111
      %p113 = scmp.eq.s32.totalorder %s19, 0
      %p114 = por %p112, %p113
      %p115 = scmp.le.s32.totalorder 1, %s13
      %p116 = scmp.lt.s32.totalorder %s13, 3
      %p117 = pnand %p115, %p116
      %p118 = pneg %p117
      // Predicated region
      $region9: #{tpu_custom_call.1} parent=5 // pred_check
        _
      $region10: #{tpu_custom_call.1} parent=5 // pred_check_branch
        %120 = sbr.rel (%p117) target = $region12
      $region11: #{tpu_custom_call.1} parent=5 // pred_region
        %s121 = ssub.s32 %s13, 1
        // Predicated region
        $region13: #{tpu_custom_call.1} parent=11 // pred_check
          %p122 = pneg %p60
        $region14: #{tpu_custom_call.1} parent=11 // pred_check_branch
          %124 = sbr.rel (%p122) target = $region16
        $region15: #{tpu_custom_call.1} parent=11 // pred_region
          _
        $region16: #{tpu_custom_call.1} parent=11 // pred_fallthru
          _
        // Predicated region
        $region17: #{tpu_custom_call.1} parent=11 // pred_check
          %p125 = pneg %p81
        $region18: #{tpu_custom_call.1} parent=11 // pred_check_branch
          %127 = sbr.rel (%p125) target = $region20
        $region19: #{tpu_custom_call.1} parent=11 // pred_region
          %s129 = ssub.s32 128, 128
          %130 = vsyncadd [#allocation3], %s129
          %s132 = sshll.u32 [#allocation2], 4
          %s133 = int_to_ptr.vmem [resolvable:$true] %s132
          %135 = dma.hbm_to_vmem [thread:$0]  %s2, 128, %s133, [#allocation3]
        $region20: #{tpu_custom_call.1} parent=11 // pred_fallthru
          _
      $region12: #{tpu_custom_call.1} parent=5 // pred_fallthru
        _
      %p136 = scmp.lt.s32.totalorder %s13, 2
      // Predicated region
      $region21: #{tpu_custom_call.1} parent=5 // pred_check
        %p137 = pneg %p136
      $region22: #{tpu_custom_call.1} parent=5 // pred_check_branch
        %139 = sbr.rel (%p137) target = $region24
      $region23: #{tpu_custom_call.1} parent=5 // pred_region
        // Predicated region
        $region25: #{tpu_custom_call.1} parent=23 // pred_check
          %p140 = pneg %p33
        $region26: #{tpu_custom_call.1} parent=23 // pred_check_branch
          %142 = sbr.rel (%p140) target = $region28
        $region27: #{tpu_custom_call.1} parent=23 // pred_region
          %p143 = scmp.lt.s32.totalorder %s13, 1
          %s144 = scalar_select %p143, %s13, 1
          %s145 = smul.addr %s144, 8
          %s146 = scalar_lea.vmem %s0, %s145
        $region28: #{tpu_custom_call.1} parent=23 // pred_fallthru
          _
      $region24: #{tpu_custom_call.1} parent=5 // pred_fallthru
        _
      %p147 = scmp.le.s32.totalorder 1, %s13
      %p148 = scmp.lt.s32.totalorder %s13, 3
      %p149 = pnand %p147, %p148
      %p150 = pneg %p149
      // Predicated region
      $region29: #{tpu_custom_call.1} parent=5 // pred_check
        _
      $region30: #{tpu_custom_call.1} parent=5 // pred_check_branch
        %152 = sbr.rel (%p149) target = $region32
      $region31: #{tpu_custom_call.1} parent=5 // pred_region
        %s153 = ssub.s32 %s13, 1
        // Predicated region
        $region33: #{tpu_custom_call.1} parent=31 // pred_check
          %p154 = pneg %p81
        $region34: #{tpu_custom_call.1} parent=31 // pred_check_branch
          %156 = sbr.rel (%p154) target = $region36
        $region35: #{tpu_custom_call.1} parent=31 // pred_region
          %157 = dma.done [#allocation3], 128
        $region36: #{tpu_custom_call.1} parent=31 // pred_fallthru
          _
        %p158 = scmp.lt.s32.totalorder %s18, 1
        %s159 = scalar_select %p158, %s18, 1
        %s160 = smul.addr %s159, 8
        %s161 = scalar_lea.vmem %s0, %s160
        %p162 = pneg %p39
        %p163 = pneg %p36
        %p164 = pneg %p60
        %p165 = pneg %p57
        %p166 = pneg %p81
        %p167 = pneg %p78
        %p168 = pneg %p107
        %p169 = pneg %p104
        %s170 = sand.u32 %s94, 1
        %s171 = scalar_lea.sflag [#allocation4], %s170
        %s172 = sand.u32 %s94, 1
        %s173 = smul.addr %s172, 8
        %s174 = scalar_lea.vmem [#allocation5], %s173
        %p175 = scmp.lt.s32.totalorder %s18, 1
        %s176 = scalar_select %p175, %s18, 1
        %s177 = smul.addr %s176, 8
        %s178 = scalar_lea.vmem %s0, %s177
        %v180 = vld [vmem:[#allocation2] sm:$0x1]
        %v181 = vld [vmem:[#allocation2 + $0x1] sm:$0x1]
        %v182 = vld [vmem:[#allocation2 + $0x2] sm:$0x1]
        %v183 = vld [vmem:[#allocation2 + $0x3] sm:$0x1]
        %v184 = vld [vmem:[#allocation2 + $0x4] sm:$0x1]
        %v185 = vld [vmem:[%s178] sm:$0xff]
        %v186 = vmin.f32 %v185, 512.0
        %188 = vset.pattern.permute.xlu0 0
        %189 = vperm.xlu0 %188, %v186
        %v190 = vpop.permute.xlu0 %189
        %v192 = vlaneseq
        %v193 = vshrl.u32 %v192, 7
        %v194 = vsub.s32 0, %v193
        %v195 = vrot.slane %v180, %v194
        %v196 = vmul.f32 %v190, %v195
        %v197 = vlaneseq
        %v198 = vshrl.u32 %v197, 7
        %v199 = vsub.s32 0, %v198
        %v200 = vrot.slane %v181, %v199
        %v201 = vadd.f32 %v196, %v200
        %v202 = vmax.f32 %v201, 0.0
        %v203 = vpack.c.bf16 %v202, %v202
        %v204 = vld [vmem:[%s1] sm:$0xf]
        %v205 = vld [vmem:[%s1 + $0x4] sm:$0xf]
        %v206 = vld [vmem:[%s1 + $0x8] sm:$0xf]
        %v207 = vld [vmem:[%s1 + $0xc] sm:$0xf]
        %v208 = vlaneseq
        %v209 = vshrl.u32 %v208, 7
        %v210 = vsub.s32 0, %v209
        %v211 = vrot.slane %v182, %v210
        %v216 = vunpack.c.l.b16 %v204
        %v217 = vunpack.c.l.b16 %v205
        %v218 = vunpack.c.l.b16 %v206
        %v219 = vunpack.c.l.b16 %v207
        %v220 = vpack.c.b16 %v217, %v216
        %v221 = vpack.c.b16 %v219, %v218
        %vm224 = vcmask 261120
        %v226 = vsel %vm224, %v203, 0
        %228 = vmatprep.subr.bf16.mxu0 0
        %229 = vmatpush1.bf16.msra.mxu0 0
        %230 = vmatprep.subr.bf16.mxu0 0
        %231 = vmatpush1.bf16.msra.mxu0 0
        %232 = vmatprep.subr.bf16.mxu0 0
        %233 = vmatpush1.bf16.msra.mxu0 0
        %234 = vmatprep.subr.bf16.mxu0 0
        %235 = vmatpush1.bf16.msra.mxu0 0
        %236 = vmatprep.subr.bf16.mxu0 0
        %237 = vmatpush1.bf16.msra.mxu0 0
        %238 = vmatprep.subr.bf16.mxu0 0
        %239 = vmatpush1.bf16.msra.mxu0 0
        %240 = vmatprep.subr.bf16.mxu0 0
        %241 = vmatpush1.bf16.msra.mxu0 %v221
        %242 = vmatprep.subr.bf16.mxu0 0
        %243 = vmatpush1.bf16.msra.mxu0 %v220
        %244 = vmatprep.subr.bf16.mxu0 0
        %245 = vmatpush2.bf16.msra.mxu0 0
        %246 = vmatprep.subr.bf16.mxu0 0
        %247 = vmatpush2.bf16.msra.mxu0 0
        %248 = vmatprep.subr.bf16.mxu0 0
        %249 = vmatpush2.bf16.msra.mxu0 0
        %250 = vmatprep.subr.bf16.mxu0 0
        %251 = vmatpush2.bf16.msra.mxu0 0
        %252 = vmatprep.subr.bf16.mxu0 0
        %253 = vmatpush2.bf16.msra.mxu0 0
        %254 = vmatprep.subr.bf16.mxu0 0
        %255 = vmatpush2.bf16.msra.mxu0 0
        %256 = vmatprep.subr.bf16.mxu0 0
        %257 = vmatpush2.bf16.msra.mxu0 0
        %258 = vmatprep.subr.bf16.mxu0 0
        %259 = vmatpush2.bf16.msra.mxu0 0
        %260 = vmatprep.mubr.bf16.mxu0 0
        %261 = vmatmul.mubr.bf16.gmra.mxu0 %v226
        %v262 = vpop.f32.mrf.mxu0
        %v263 = vadd.f32 %v211, %v262
        %v264 = vpop.f32.mrf.mxu0
        %v265 = vpop.f32.mrf.mxu0
        %v266 = vpop.f32.mrf.mxu0
        %267 = vdwg.mxu0
        %v268 = vsel %vm224, %v263, 0.0
        %269 = vadd.xlane.f32.xlu0 %v268
        %v270 = vpop.xlane.xlu0 %269
        %v271 = vrcp.pop 32.0
        %v272 = vmul.f32 %v270, %v271
        %v273 = vsub.f32 %v263, %v272
        %v274 = vmul.f32 %v273, %v273
        %v275 = vsel %vm224, %v274, 0.0
        %276 = vadd.xlane.f32.xlu0 %v275
        %v277 = vpop.xlane.xlu0 %276
        %v278 = vmul.f32 %v277, %v271
        %v279 = vadd.f32 %v278, 1e-05
        %v280 = vrsqrt.pop %v279
        %v281 = vmul.f32 %v273, %v280
        %v282 = vlaneseq
        %v283 = vshrl.u32 %v282, 7
        %v284 = vsub.s32 0, %v283
        %v285 = vrot.slane %v183, %v284
        %v286 = vmul.f32 %v281, %v285
        %v287 = vlaneseq
        %v288 = vshrl.u32 %v287, 7
        %v289 = vsub.s32 0, %v288
        %v290 = vrot.slane %v184, %v289
        %v291 = vadd.f32 %v286, %v290
        %292 = vst.msk [vmem:[%s174] sm:$0xff] %vm224, %v291
        %s293 = sand.u32 %s94, 1
        %s294 = scalar_lea.sflag [#allocation4], %s293
        %s295 = sand.u32 %s94, 1
        %s296 = smul.addr %s295, 8
        %s297 = scalar_lea.vmem [#allocation5], %s296
        // Predicated region
        $region37: #{tpu_custom_call.1} parent=31 // pred_check
          %p298 = pneg %p104
        $region38: #{tpu_custom_call.1} parent=31 // pred_check_branch
          %300 = sbr.rel (%p298) target = $region40
        $region39: #{tpu_custom_call.1} parent=31 // pred_region
          %s302 = ssub.s32 128, 128
          %303 = vsyncadd %s294, %s302
          %s304 = smul.addr %s18, 128
          %s305 = scalar_lea.hbm %s3, %s304
          %s307 = sshll.u32 %s297, 4
          %s308 = int_to_ptr.vmem [resolvable:$true] %s307
          %310 = dma.vmem_to_hbm [thread:$0]  %s308, 128, %s305, %s294
        $region40: #{tpu_custom_call.1} parent=31 // pred_fallthru
          _
      $region32: #{tpu_custom_call.1} parent=5 // pred_fallthru
        _
      %p311 = scmp.le.s32.totalorder 2, %s13
      // Predicated region
      $region41: #{tpu_custom_call.1} parent=5 // pred_check
        %p312 = pneg %p311
      $region42: #{tpu_custom_call.1} parent=5 // pred_check_branch
        %314 = sbr.rel (%p312) target = $region44
      $region43: #{tpu_custom_call.1} parent=5 // pred_region
        %s315 = ssub.s32 %s13, 2
        // Predicated region
        $region45: #{tpu_custom_call.1} parent=43 // pred_check
          %p316 = pneg %p110
        $region46: #{tpu_custom_call.1} parent=43 // pred_check_branch
          %318 = sbr.rel (%p316) target = $region48
        $region47: #{tpu_custom_call.1} parent=43 // pred_region
          %s319 = sand.u32 %s95, 1
          %s320 = scalar_lea.sflag [#allocation4], %s319
          %s321 = sand.u32 %s95, 1
          %s322 = smul.addr %s321, 8
          %s323 = scalar_lea.vmem [#allocation5], %s322
          %324 = dma.done %s320, 128
        $region48: #{tpu_custom_call.1} parent=43 // pred_fallthru
          _
      $region44: #{tpu_custom_call.1} parent=5 // pred_fallthru
        _
    $region6: #{tpu_custom_call.1} parent=1 // loop_footer
      %s17 = sadd.s32 1, %s13
    $region7: #{tpu_custom_call.1} parent=1 // loop_footer_branch
      %12 = sbr.rel target = $region3
    $region8: #{tpu_custom_call.1} parent=1 // loop_exit
      _
    %325 = vsyncpa [#allocation3], 1
    %s326 = scalar_lea.sflag [#allocation3], 1
    %327 = vsyncpa %s326, 1
    %328 = vsyncpa [#allocation4], 1
    %s329 = scalar_lea.sflag [#allocation4], 1
    %330 = vsyncpa %s329, 1

</llo_original>
